<compile_context>
chip_gen: v5e
topology: v5e:2x2
jax: 0.10.0
libtpu: 0.0.40
codegen_flags: <defaults>
</compile_context>

<pallas_src>
import functools
from typing import NamedTuple

import jax
import jax.numpy as jnp
from jax.experimental import pallas as pl
from jax.experimental.pallas import tpu as pltpu

BN_EPS = 1e-5
LANE = 128


def _pad_to(n, m=LANE):
    return ((n + m - 1) // m) * m


class VAEDims(NamedTuple):
    f: int     # true flattened input size
    fp: int    # padded input size
    e1p: int   # padded encoder lin1
    e2p: int   # padded encoder lin2
    lat: int   # true latent size
    lp: int    # padded latent size
    d1p: int   # padded decoder lin1
    d2p: int   # padded decoder lin2


def _vec_layout(dims):
    """Static offsets of the packed (1, total) parameter-vector input."""
    sizes = [
        ("g1", dims.e1p), ("be1", dims.e1p),
        ("g2", dims.e2p), ("be2", dims.e2p),
        ("gd1", dims.d1p), ("bed1", dims.d1p),
        ("gd2", dims.d2p), ("bed2", dims.d2p),
        ("bh", 2 * dims.lp), ("bd3", dims.fp),
    ]
    offs, off = {}, 0
    for name, w in sizes:
        offs[name] = (off, w)
        off += w
    return offs, off


# -------------------------------------------------------------------------
# Kernel
# -------------------------------------------------------------------------
def _bn_relu(h, gamma, beta):
    """Training-mode BatchNorm1d + ReLU, one-pass scale/shift form."""
    mu = jnp.mean(h, axis=0, keepdims=True)
    m2 = jnp.mean(h * h, axis=0, keepdims=True)
    var = jnp.maximum(m2 - mu * mu, 0.0)          # biased batch variance
    scale = gamma * jax.lax.rsqrt(var + BN_EPS)   # (1, N) -- tiny
    shift = beta - mu * scale
    return jnp.maximum(h * scale + shift, 0.0)


def vae_kernel(
    x_ref, eps_ref,
    w1_ref, w2_ref, wh_ref, wd1_ref, wd2_ref, wd3_ref,
    vec_ref,
    xhat_ref, head_ref,
    *, lp, offs,
):
    def vec(name):
        off, w = offs[name]
        return vec_ref[:, off:off + w]            # static, 128-aligned slice

    def mm(a, w_ref):
        w = w_ref[...]
        # cast activation to the weight dtype (bf16 path) but accumulate in f32
        return jnp.dot(a.astype(w.dtype), w, preferred_element_type=jnp.float32)

    x = x_ref[...]

    # ---- encoder (pre-BN biases dropped: cancelled by the mean subtraction) ----
    h1 = _bn_relu(mm(x, w1_ref), vec("g1"), vec("be1"))
    h2 = _bn_relu(mm(h1, w2_ref), vec("g2"), vec("be2"))

    # ---- fused mean|logvar head: one matmul, one lane-dense output ----
    head = mm(h2, wh_ref) + vec("bh")             # (B, 2*lp)
    mean = head[:, :lp]
    logvar = head[:, lp:]

    # ---- reparameterization: z = mean + eps * exp(0.5 * logvar) ----
    z = mean + eps_ref[...] * jnp.exp(0.5 * logvar)

    # ---- decoder ----
    d1 = _bn_relu(mm(z, wd1_ref), vec("gd1"), vec("bed1"))
    d2 = _bn_relu(mm(d1, wd2_ref), vec("gd2"), vec("bed2"))
    logits = mm(d2, wd3_ref) + vec("bd3")

    xhat_ref[...] = jax.nn.sigmoid(logits)
    head_ref[...] = head


# -------------------------------------------------------------------------
# Parameter preparation (done once, outside jit)
# -------------------------------------------------------------------------
def init_params(key, input_size, e1, e2, latent, d1, d2):
    """PyTorch-Linear-style init. Weights stored (in, out), biases 1-D."""
    def linear(k, fan_in, fan_out):
        k1, k2 = jax.random.split(k)
        bound = 1.0 / (fan_in ** 0.5)
        w = jax.random.uniform(k1, (fan_in, fan_out), jnp.float32, -bound, bound)
        b = jax.random.uniform(k2, (fan_out,), jnp.float32, -bound, bound)
        return w, b

    keys = jax.random.split(key, 7)
    p = {}
    p["w1"], p["b1"] = linear(keys[0], input_size, e1)
    p["g1"], p["be1"] = jnp.ones((e1,), jnp.float32), jnp.zeros((e1,), jnp.float32)
    p["w2"], p["b2"] = linear(keys[1], e1, e2)
    p["g2"], p["be2"] = jnp.ones((e2,), jnp.float32), jnp.zeros((e2,), jnp.float32)
    p["wm"], p["bm"] = linear(keys[2], e2, latent)
    p["wl"], p["bl"] = linear(keys[3], e2, latent)
    p["wd1"], p["bd1"] = linear(keys[4], latent, d1)
    p["gd1"], p["bed1"] = jnp.ones((d1,), jnp.float32), jnp.zeros((d1,), jnp.float32)
    p["wd2"], p["bd2"] = linear(keys[5], d1, d2)
    p["gd2"], p["bed2"] = jnp.ones((d2,), jnp.float32), jnp.zeros((d2,), jnp.float32)
    p["wd3"], p["bd3"] = linear(keys[6], d2, input_size)
    return p


def prepare_params(params, *, input_size, enc1, enc2, latent, dec1, dec2,
                   matmul_dtype=jnp.float32):
    """Pad feature dims to 128, fuse the mean/logvar head, pack small vectors."""
    dims = VAEDims(
        f=input_size, fp=_pad_to(input_size),
        e1p=_pad_to(enc1), e2p=_pad_to(enc2),
        lat=latent, lp=_pad_to(latent),
        d1p=_pad_to(dec1), d2p=_pad_to(dec2),
    )

    def pad_w(w, rp, cp):
        r, c = w.shape
        return jnp.pad(w, ((0, rp - r), (0, cp - c))).astype(matmul_dtype)

    def pad_v(v, n):
        v = jnp.asarray(v, jnp.float32).reshape(-1)
        return jnp.pad(v, (0, n - v.shape[0]))

    packed = {
        "w1": pad_w(params["w1"], dims.fp, dims.e1p),
        "w2": pad_w(params["w2"], dims.e1p, dims.e2p),
        "wd1": pad_w(params["wd1"], dims.lp, dims.d1p),
        "wd2": pad_w(params["wd2"], dims.d1p, dims.d2p),
        "wd3": pad_w(params["wd3"], dims.d2p, dims.fp),
    }

    # fused mean|logvar head: columns [0, lp) -> mean, [lp, 2*lp) -> logvar
    wh = jnp.zeros((dims.e2p, 2 * dims.lp), jnp.float32)
    wh = wh.at[:enc2, :latent].set(params["wm"])
    wh = wh.at[:enc2, dims.lp:dims.lp + latent].set(params["wl"])
    packed["wh"] = wh.astype(matmul_dtype)

    bh = jnp.zeros((2 * dims.lp,), jnp.float32)
    bh = bh.at[:latent].set(params["bm"].reshape(-1))
    bh = bh.at[dims.lp:dims.lp + latent].set(params["bl"].reshape(-1))

    # NOTE: b1/b2/bd1/bd2 are NOT packed: a bias added before training-mode BN is
    # exactly cancelled by the batch-mean subtraction, so it is dead work.
    offs, total = _vec_layout(dims)
    pieces = {
        "g1": pad_v(params["g1"], dims.e1p),   "be1": pad_v(params["be1"], dims.e1p),
        "g2": pad_v(params["g2"], dims.e2p),   "be2": pad_v(params["be2"], dims.e2p),
        "gd1": pad_v(params["gd1"], dims.d1p), "bed1": pad_v(params["bed1"], dims.d1p),
        "gd2": pad_v(params["gd2"], dims.d2p), "bed2": pad_v(params["bed2"], dims.d2p),
        "bh": bh,                              "bd3": pad_v(params["bd3"], dims.fp),
    }
    vec = jnp.zeros((total,), jnp.float32)
    for name, (off, w) in offs.items():
        vec = vec.at[off:off + w].set(pieces[name])
    packed["vec"] = vec.reshape(1, total)

    return packed, dims


# -------------------------------------------------------------------------
# Wrapper
# -------------------------------------------------------------------------
@functools.partial(jax.jit, static_argnames=("dims",))
def dense_image_vae_with_bn(x, eps, packed, *, dims):
    """x: NCHW image tensor. Returns (x_hat in x.shape, mean, logvar)."""
    B = x.shape[0]
    xf = jnp.pad(x.reshape(B, -1).astype(jnp.float32),
                 ((0, 0), (0, dims.fp - dims.f)))
    eps_p = jnp.pad(eps.astype(jnp.float32),
                    ((0, 0), (0, dims.lp - dims.lat)))

    offs, _ = _vec_layout(dims)
    kernel = functools.partial(vae_kernel, lp=dims.lp, offs=offs)

    inputs = (xf, eps_p,
              packed["w1"], packed["w2"], packed["wh"],
              packed["wd1"], packed["wd2"], packed["wd3"],
              packed["vec"])

    out_shape = (
        jax.ShapeDtypeStruct((B, dims.fp), jnp.float32),       # x_hat slab
        jax.ShapeDtypeStruct((B, 2 * dims.lp), jnp.float32),    # [mean | logvar]
    )

    # Tight, generation-aware VMEM budget (cap well below v7x's 64 MiB/TC).
    total_bytes = sum(int(a.size) * a.dtype.itemsize for a in inputs)
    total_bytes += B * (dims.fp + 2 * dims.lp) * 4                               # outputs
    total_bytes += B * (dims.e1p + dims.e2p + dims.lp + dims.d1p + dims.d2p
                        + dims.fp) * 4                                            # activations
    vmem_limit = int(min(max(3 * total_bytes, 8 << 20), 48 << 20))

    vmem = pl.BlockSpec(memory_space=pltpu.MemorySpace.VMEM)
    xhat_pad, head = pl.pallas_call(
        kernel,
        out_shape=out_shape,
        in_specs=[vmem] * len(inputs),
        out_specs=(vmem, vmem),
        compiler_params=pltpu.CompilerParams(vmem_limit_bytes=vmem_limit),
    )(*inputs)

    x_hat = xhat_pad[:, :dims.f].reshape(x.shape)
    mean = head[:, :dims.lat]
    logvar = head[:, dims.lp:dims.lp + dims.lat]
    return x_hat, mean, logvar


# -------------------------------------------------------------------------
# Pure-JAX reference (for a sanity check only)
# -------------------------------------------------------------------------
def _reference_forward(x, eps, p):
    def mmh(a, b):
        return jnp.dot(a, b, precision=jax.lax.Precision.HIGHEST)

    def bn_relu(h, g, b):
        mu = h.mean(0, keepdims=True)
        var = ((h - mu) ** 2).mean(0, keepdims=True)
        return jnp.maximum((h - mu) / jnp.sqrt(var + BN_EPS) * g + b, 0.0)

    B = x.shape[0]
    h = x.reshape(B, -1)
    h1 = bn_relu(mmh(h, p["w1"]) + p["b1"], p["g1"], p["be1"])
    h2 = bn_relu(mmh(h1, p["w2"]) + p["b2"], p["g2"], p["be2"])
    mean = mmh(h2, p["wm"]) + p["bm"]
    logvar = mmh(h2, p["wl"]) + p["bl"]
    z = mean + eps * jnp.exp(0.5 * logvar)
    d1 = bn_relu(mmh(z, p["wd1"]) + p["bd1"], p["gd1"], p["bed1"])
    d2 = bn_relu(mmh(d1, p["wd2"]) + p["bd2"], p["gd2"], p["bed2"])
    x_hat = jax.nn.sigmoid(mmh(d2, p["wd3"]) + p["bd3"])
    return x_hat.reshape(x.shape), mean, logvar


if __name__ == "__main__":
    # Small shapes consistent with the module: (B, C, H, W) = (8, 1, 16, 16)
    B, C, H, W = 8, 1, 16, 16
    input_size = C * H * W
    enc1, enc2, latent, dec1, dec2 = 128, 64, 16, 64, 128

    key = jax.random.PRNGKey(0)
    k_x, k_eps, k_p = jax.random.split(key, 3)

    x = jax.random.uniform(k_x, (B, C, H, W), jnp.float32)     # NCHW input
    eps = jax.random.normal(k_eps, (B, latent), jnp.float32)   # reparam noise

    raw = init_params(k_p, input_size, enc1, enc2, latent, dec1, dec2)
    # matmul_dtype=jnp.bfloat16 is the recommended v6e/v7x setting (f32 accumulation);
    # f32 kept here so the small-shape run matches the PyTorch f32 forward exactly.
    packed, dims = prepare_params(
        raw, input_size=input_size, enc1=enc1, enc2=enc2,
        latent=latent, dec1=dec1, dec2=dec2, matmul_dtype=jnp.float32)

    x_hat, mean, logvar = dense_image_vae_with_bn(x, eps, packed, dims=dims)
    jax.block_until_ready((x_hat, mean, logvar))

    assert x_hat.shape == x.shape
    assert mean.shape == (B, latent)
    assert logvar.shape == (B, latent)
    assert bool(jnp.isfinite(x_hat).all())
    assert bool(jnp.isfinite(mean).all())
    assert bool(jnp.isfinite(logvar).all())

    # Loose-tolerance structural check against a pure-JAX reference
    # (tolerance is loose to stay robust to matmul precision differences).
    ref_xh, ref_mean, ref_logvar = _reference_forward(x, eps, raw)
    for got, want in ((x_hat, ref_xh), (mean, ref_mean), (logvar, ref_logvar)):
        err = float(jnp.max(jnp.abs(got - want)))
        assert err < 0.1, f"mismatch vs reference: {err}"

    print("KERNEL_OK")
</pallas_src>

<mosaic_0001>
module attributes {stable_mosaic.version = 11 : i64} {
  func.func @vae_kernel(%arg0: memref<8x256xf32, #tpu.memory_space<vmem>>, %arg1: memref<8x128xf32, #tpu.memory_space<vmem>>, %arg2: memref<256x128xf32, #tpu.memory_space<vmem>>, %arg3: memref<128x128xf32, #tpu.memory_space<vmem>>, %arg4: memref<128x256xf32, #tpu.memory_space<vmem>>, %arg5: memref<128x128xf32, #tpu.memory_space<vmem>>, %arg6: memref<128x128xf32, #tpu.memory_space<vmem>>, %arg7: memref<128x256xf32, #tpu.memory_space<vmem>>, %arg8: memref<1x1536xf32, #tpu.memory_space<vmem>>, %arg9: memref<8x256xf32, #tpu.memory_space<vmem>>, %arg10: memref<8x256xf32, #tpu.memory_space<vmem>>) attributes {dimension_semantics = [], scalar_prefetch = 0 : i64, scratch_operands = 0 : i64, tpu.core_type = #tpu.core_type<tc>} {
    %c0 = arith.constant 0 : index
    %c0_0 = arith.constant 0 : index
    %0 = vector.load %arg0[%c0, %c0_0] : memref<8x256xf32, #tpu.memory_space<vmem>>, vector<8x256xf32>
    %c0_1 = arith.constant 0 : index
    %c0_2 = arith.constant 0 : index
    %1 = vector.load %arg2[%c0_1, %c0_2] : memref<256x128xf32, #tpu.memory_space<vmem>>, vector<256x128xf32>
    %cst = arith.constant dense<0.000000e+00> : vector<8x128xf32>
    %2 = tpu.matmul %0, %1, %cst {dimension_numbers = #tpu.dot_dimension_numbers<[1], [0], [0], [1], [0, 0, 1, 1], [], []>} : vector<8x256xf32>, vector<256x128xf32>, vector<8x128xf32> -> vector<8x128xf32>
    %c0_3 = arith.constant 0 : index
    %c0_4 = arith.constant 0 : index
    %3 = vector.load %arg8[%c0_3, %c0_4] : memref<1x1536xf32, #tpu.memory_space<vmem>>, vector<1x128xf32>
    %c0_5 = arith.constant 0 : index
    %c128 = arith.constant 128 : index
    %4 = vector.load %arg8[%c0_5, %c128] : memref<1x1536xf32, #tpu.memory_space<vmem>>, vector<1x128xf32>
    %cst_6 = arith.constant dense<0.000000e+00> : vector<128xf32>
    %5 = vector.multi_reduction <add>, %2, %cst_6 [0] : vector<8x128xf32> to vector<128xf32>
    %6 = vector.shape_cast %5 : vector<128xf32> to vector<1x128xf32>
    %cst_7 = arith.constant 8.000000e+00 : f32
    %7 = vector.broadcast %cst_7 : f32 to vector<1x128xf32>
    %8 = arith.divf %6, %7 : vector<1x128xf32>
    %9 = arith.mulf %2, %2 : vector<8x128xf32>
    %cst_8 = arith.constant dense<0.000000e+00> : vector<128xf32>
    %10 = vector.multi_reduction <add>, %9, %cst_8 [0] : vector<8x128xf32> to vector<128xf32>
    %11 = vector.shape_cast %10 : vector<128xf32> to vector<1x128xf32>
    %cst_9 = arith.constant 8.000000e+00 : f32
    %12 = vector.broadcast %cst_9 : f32 to vector<1x128xf32>
    %13 = arith.divf %11, %12 : vector<1x128xf32>
    %14 = arith.mulf %8, %8 : vector<1x128xf32>
    %15 = arith.subf %13, %14 : vector<1x128xf32>
    %cst_10 = arith.constant 0.000000e+00 : f32
    %16 = vector.broadcast %cst_10 : f32 to vector<1x128xf32>
    %17 = arith.maximumf %15, %16 : vector<1x128xf32>
    %cst_11 = arith.constant 9.99999974E-6 : f32
    %18 = vector.broadcast %cst_11 : f32 to vector<1x128xf32>
    %19 = arith.addf %17, %18 : vector<1x128xf32>
    %20 = math.rsqrt %19 : vector<1x128xf32>
    %21 = arith.mulf %3, %20 : vector<1x128xf32>
    %22 = arith.mulf %8, %21 : vector<1x128xf32>
    %23 = arith.subf %4, %22 : vector<1x128xf32>
    %24 = vector.broadcast %21 : vector<1x128xf32> to vector<8x128xf32>
    %25 = arith.mulf %2, %24 : vector<8x128xf32>
    %26 = vector.broadcast %23 : vector<1x128xf32> to vector<8x128xf32>
    %27 = arith.addf %25, %26 : vector<8x128xf32>
    %cst_12 = arith.constant 0.000000e+00 : f32
    %28 = vector.broadcast %cst_12 : f32 to vector<8x128xf32>
    %29 = arith.maximumf %27, %28 : vector<8x128xf32>
    %c0_13 = arith.constant 0 : index
    %c0_14 = arith.constant 0 : index
    %30 = vector.load %arg3[%c0_13, %c0_14] : memref<128x128xf32, #tpu.memory_space<vmem>>, vector<128x128xf32>
    %cst_15 = arith.constant dense<0.000000e+00> : vector<8x128xf32>
    %31 = tpu.matmul %29, %30, %cst_15 {dimension_numbers = #tpu.dot_dimension_numbers<[1], [0], [0], [1], [0, 0, 1, 1], [], []>} : vector<8x128xf32>, vector<128x128xf32>, vector<8x128xf32> -> vector<8x128xf32>
    %c0_16 = arith.constant 0 : index
    %c256 = arith.constant 256 : index
    %32 = vector.load %arg8[%c0_16, %c256] : memref<1x1536xf32, #tpu.memory_space<vmem>>, vector<1x128xf32>
    %c0_17 = arith.constant 0 : index
    %c384 = arith.constant 384 : index
    %33 = vector.load %arg8[%c0_17, %c384] : memref<1x1536xf32, #tpu.memory_space<vmem>>, vector<1x128xf32>
    %cst_18 = arith.constant dense<0.000000e+00> : vector<128xf32>
    %34 = vector.multi_reduction <add>, %31, %cst_18 [0] : vector<8x128xf32> to vector<128xf32>
    %35 = vector.shape_cast %34 : vector<128xf32> to vector<1x128xf32>
    %cst_19 = arith.constant 8.000000e+00 : f32
    %36 = vector.broadcast %cst_19 : f32 to vector<1x128xf32>
    %37 = arith.divf %35, %36 : vector<1x128xf32>
    %38 = arith.mulf %31, %31 : vector<8x128xf32>
    %cst_20 = arith.constant dense<0.000000e+00> : vector<128xf32>
    %39 = vector.multi_reduction <add>, %38, %cst_20 [0] : vector<8x128xf32> to vector<128xf32>
    %40 = vector.shape_cast %39 : vector<128xf32> to vector<1x128xf32>
    %cst_21 = arith.constant 8.000000e+00 : f32
    %41 = vector.broadcast %cst_21 : f32 to vector<1x128xf32>
    %42 = arith.divf %40, %41 : vector<1x128xf32>
    %43 = arith.mulf %37, %37 : vector<1x128xf32>
    %44 = arith.subf %42, %43 : vector<1x128xf32>
    %cst_22 = arith.constant 0.000000e+00 : f32
    %45 = vector.broadcast %cst_22 : f32 to vector<1x128xf32>
    %46 = arith.maximumf %44, %45 : vector<1x128xf32>
    %cst_23 = arith.constant 9.99999974E-6 : f32
    %47 = vector.broadcast %cst_23 : f32 to vector<1x128xf32>
    %48 = arith.addf %46, %47 : vector<1x128xf32>
    %49 = math.rsqrt %48 : vector<1x128xf32>
    %50 = arith.mulf %32, %49 : vector<1x128xf32>
    %51 = arith.mulf %37, %50 : vector<1x128xf32>
    %52 = arith.subf %33, %51 : vector<1x128xf32>
    %53 = vector.broadcast %50 : vector<1x128xf32> to vector<8x128xf32>
    %54 = arith.mulf %31, %53 : vector<8x128xf32>
    %55 = vector.broadcast %52 : vector<1x128xf32> to vector<8x128xf32>
    %56 = arith.addf %54, %55 : vector<8x128xf32>
    %cst_24 = arith.constant 0.000000e+00 : f32
    %57 = vector.broadcast %cst_24 : f32 to vector<8x128xf32>
    %58 = arith.maximumf %56, %57 : vector<8x128xf32>
    %c0_25 = arith.constant 0 : index
    %c0_26 = arith.constant 0 : index
    %59 = vector.load %arg4[%c0_25, %c0_26] : memref<128x256xf32, #tpu.memory_space<vmem>>, vector<128x256xf32>
    %cst_27 = arith.constant dense<0.000000e+00> : vector<8x256xf32>
    %60 = tpu.matmul %58, %59, %cst_27 {dimension_numbers = #tpu.dot_dimension_numbers<[1], [0], [0], [1], [0, 0, 1, 1], [], []>} : vector<8x128xf32>, vector<128x256xf32>, vector<8x256xf32> -> vector<8x256xf32>
    %c0_28 = arith.constant 0 : index
    %c1024 = arith.constant 1024 : index
    %61 = vector.load %arg8[%c0_28, %c1024] : memref<1x1536xf32, #tpu.memory_space<vmem>>, vector<1x256xf32>
    %62 = vector.broadcast %61 : vector<1x256xf32> to vector<8x256xf32>
    %63 = arith.addf %60, %62 : vector<8x256xf32>
    %64 = vector.extract_strided_slice %63 {offsets = [0, 0], sizes = [8, 128], strides = [1, 1]} : vector<8x256xf32> to vector<8x128xf32>
    %65 = vector.extract_strided_slice %63 {offsets = [0, 128], sizes = [8, 128], strides = [1, 1]} : vector<8x256xf32> to vector<8x128xf32>
    %c0_29 = arith.constant 0 : index
    %c0_30 = arith.constant 0 : index
    %66 = vector.load %arg1[%c0_29, %c0_30] : memref<8x128xf32, #tpu.memory_space<vmem>>, vector<8x128xf32>
    %cst_31 = arith.constant 5.000000e-01 : f32
    %67 = vector.broadcast %cst_31 : f32 to vector<8x128xf32>
    %68 = arith.mulf %67, %65 : vector<8x128xf32>
    %69 = math.exp %68 : vector<8x128xf32>
    %70 = arith.mulf %66, %69 : vector<8x128xf32>
    %71 = arith.addf %64, %70 : vector<8x128xf32>
    %c0_32 = arith.constant 0 : index
    %c0_33 = arith.constant 0 : index
    %72 = vector.load %arg5[%c0_32, %c0_33] : memref<128x128xf32, #tpu.memory_space<vmem>>, vector<128x128xf32>
    %cst_34 = arith.constant dense<0.000000e+00> : vector<8x128xf32>
    %73 = tpu.matmul %71, %72, %cst_34 {dimension_numbers = #tpu.dot_dimension_numbers<[1], [0], [0], [1], [0, 0, 1, 1], [], []>} : vector<8x128xf32>, vector<128x128xf32>, vector<8x128xf32> -> vector<8x128xf32>
    %c0_35 = arith.constant 0 : index
    %c512 = arith.constant 512 : index
    %74 = vector.load %arg8[%c0_35, %c512] : memref<1x1536xf32, #tpu.memory_space<vmem>>, vector<1x128xf32>
    %c0_36 = arith.constant 0 : index
    %c640 = arith.constant 640 : index
    %75 = vector.load %arg8[%c0_36, %c640] : memref<1x1536xf32, #tpu.memory_space<vmem>>, vector<1x128xf32>
    %cst_37 = arith.constant dense<0.000000e+00> : vector<128xf32>
    %76 = vector.multi_reduction <add>, %73, %cst_37 [0] : vector<8x128xf32> to vector<128xf32>
    %77 = vector.shape_cast %76 : vector<128xf32> to vector<1x128xf32>
    %cst_38 = arith.constant 8.000000e+00 : f32
    %78 = vector.broadcast %cst_38 : f32 to vector<1x128xf32>
    %79 = arith.divf %77, %78 : vector<1x128xf32>
    %80 = arith.mulf %73, %73 : vector<8x128xf32>
    %cst_39 = arith.constant dense<0.000000e+00> : vector<128xf32>
    %81 = vector.multi_reduction <add>, %80, %cst_39 [0] : vector<8x128xf32> to vector<128xf32>
    %82 = vector.shape_cast %81 : vector<128xf32> to vector<1x128xf32>
    %cst_40 = arith.constant 8.000000e+00 : f32
    %83 = vector.broadcast %cst_40 : f32 to vector<1x128xf32>
    %84 = arith.divf %82, %83 : vector<1x128xf32>
    %85 = arith.mulf %79, %79 : vector<1x128xf32>
    %86 = arith.subf %84, %85 : vector<1x128xf32>
    %cst_41 = arith.constant 0.000000e+00 : f32
    %87 = vector.broadcast %cst_41 : f32 to vector<1x128xf32>
    %88 = arith.maximumf %86, %87 : vector<1x128xf32>
    %cst_42 = arith.constant 9.99999974E-6 : f32
    %89 = vector.broadcast %cst_42 : f32 to vector<1x128xf32>
    %90 = arith.addf %88, %89 : vector<1x128xf32>
    %91 = math.rsqrt %90 : vector<1x128xf32>
    %92 = arith.mulf %74, %91 : vector<1x128xf32>
    %93 = arith.mulf %79, %92 : vector<1x128xf32>
    %94 = arith.subf %75, %93 : vector<1x128xf32>
    %95 = vector.broadcast %92 : vector<1x128xf32> to vector<8x128xf32>
    %96 = arith.mulf %73, %95 : vector<8x128xf32>
    %97 = vector.broadcast %94 : vector<1x128xf32> to vector<8x128xf32>
    %98 = arith.addf %96, %97 : vector<8x128xf32>
    %cst_43 = arith.constant 0.000000e+00 : f32
    %99 = vector.broadcast %cst_43 : f32 to vector<8x128xf32>
    %100 = arith.maximumf %98, %99 : vector<8x128xf32>
    %c0_44 = arith.constant 0 : index
    %c0_45 = arith.constant 0 : index
    %101 = vector.load %arg6[%c0_44, %c0_45] : memref<128x128xf32, #tpu.memory_space<vmem>>, vector<128x128xf32>
    %cst_46 = arith.constant dense<0.000000e+00> : vector<8x128xf32>
    %102 = tpu.matmul %100, %101, %cst_46 {dimension_numbers = #tpu.dot_dimension_numbers<[1], [0], [0], [1], [0, 0, 1, 1], [], []>} : vector<8x128xf32>, vector<128x128xf32>, vector<8x128xf32> -> vector<8x128xf32>
    %c0_47 = arith.constant 0 : index
    %c768 = arith.constant 768 : index
    %103 = vector.load %arg8[%c0_47, %c768] : memref<1x1536xf32, #tpu.memory_space<vmem>>, vector<1x128xf32>
    %c0_48 = arith.constant 0 : index
    %c896 = arith.constant 896 : index
    %104 = vector.load %arg8[%c0_48, %c896] : memref<1x1536xf32, #tpu.memory_space<vmem>>, vector<1x128xf32>
    %cst_49 = arith.constant dense<0.000000e+00> : vector<128xf32>
    %105 = vector.multi_reduction <add>, %102, %cst_49 [0] : vector<8x128xf32> to vector<128xf32>
    %106 = vector.shape_cast %105 : vector<128xf32> to vector<1x128xf32>
    %cst_50 = arith.constant 8.000000e+00 : f32
    %107 = vector.broadcast %cst_50 : f32 to vector<1x128xf32>
    %108 = arith.divf %106, %107 : vector<1x128xf32>
    %109 = arith.mulf %102, %102 : vector<8x128xf32>
    %cst_51 = arith.constant dense<0.000000e+00> : vector<128xf32>
    %110 = vector.multi_reduction <add>, %109, %cst_51 [0] : vector<8x128xf32> to vector<128xf32>
    %111 = vector.shape_cast %110 : vector<128xf32> to vector<1x128xf32>
    %cst_52 = arith.constant 8.000000e+00 : f32
    %112 = vector.broadcast %cst_52 : f32 to vector<1x128xf32>
    %113 = arith.divf %111, %112 : vector<1x128xf32>
    %114 = arith.mulf %108, %108 : vector<1x128xf32>
    %115 = arith.subf %113, %114 : vector<1x128xf32>
    %cst_53 = arith.constant 0.000000e+00 : f32
    %116 = vector.broadcast %cst_53 : f32 to vector<1x128xf32>
    %117 = arith.maximumf %115, %116 : vector<1x128xf32>
    %cst_54 = arith.constant 9.99999974E-6 : f32
    %118 = vector.broadcast %cst_54 : f32 to vector<1x128xf32>
    %119 = arith.addf %117, %118 : vector<1x128xf32>
    %120 = math.rsqrt %119 : vector<1x128xf32>
    %121 = arith.mulf %103, %120 : vector<1x128xf32>
    %122 = arith.mulf %108, %121 : vector<1x128xf32>
    %123 = arith.subf %104, %122 : vector<1x128xf32>
    %124 = vector.broadcast %121 : vector<1x128xf32> to vector<8x128xf32>
    %125 = arith.mulf %102, %124 : vector<8x128xf32>
    %126 = vector.broadcast %123 : vector<1x128xf32> to vector<8x128xf32>
    %127 = arith.addf %125, %126 : vector<8x128xf32>
    %cst_55 = arith.constant 0.000000e+00 : f32
    %128 = vector.broadcast %cst_55 : f32 to vector<8x128xf32>
    %129 = arith.maximumf %127, %128 : vector<8x128xf32>
    %c0_56 = arith.constant 0 : index
    %c0_57 = arith.constant 0 : index
    %130 = vector.load %arg7[%c0_56, %c0_57] : memref<128x256xf32, #tpu.memory_space<vmem>>, vector<128x256xf32>
    %cst_58 = arith.constant dense<0.000000e+00> : vector<8x256xf32>
    %131 = tpu.matmul %129, %130, %cst_58 {dimension_numbers = #tpu.dot_dimension_numbers<[1], [0], [0], [1], [0, 0, 1, 1], [], []>} : vector<8x128xf32>, vector<128x256xf32>, vector<8x256xf32> -> vector<8x256xf32>
    %c0_59 = arith.constant 0 : index
    %c1280 = arith.constant 1280 : index
    %132 = vector.load %arg8[%c0_59, %c1280] : memref<1x1536xf32, #tpu.memory_space<vmem>>, vector<1x256xf32>
    %133 = vector.broadcast %132 : vector<1x256xf32> to vector<8x256xf32>
    %134 = arith.addf %131, %133 : vector<8x256xf32>
    %135 = arith.negf %134 : vector<8x256xf32>
    %136 = math.exp %135 : vector<8x256xf32>
    %cst_60 = arith.constant 1.000000e+00 : f32
    %137 = vector.broadcast %cst_60 : f32 to vector<8x256xf32>
    %138 = arith.addf %137, %136 : vector<8x256xf32>
    %139 = arith.divf %137, %138 : vector<8x256xf32>
    %c0_61 = arith.constant 0 : index
    %c0_62 = arith.constant 0 : index
    %140 = vector.load %arg9[%c0_61, %c0_62] : memref<8x256xf32, #tpu.memory_space<vmem>>, vector<8x256xf32>
    tpu.vector_store %arg9[%c0_61, %c0_62], %139 {strides = array<i32>} : memref<8x256xf32, #tpu.memory_space<vmem>>, vector<8x256xf32>,
    %c0_63 = arith.constant 0 : index
    %c0_64 = arith.constant 0 : index
    %141 = vector.load %arg10[%c0_63, %c0_64] : memref<8x256xf32, #tpu.memory_space<vmem>>, vector<8x256xf32>
    tpu.vector_store %arg10[%c0_63, %c0_64], %63 {strides = array<i32>} : memref<8x256xf32, #tpu.memory_space<vmem>>, vector<8x256xf32>,
    return
  }
}

</mosaic_0001>

<llo_original>
// kernel: dense_image_vae_with_bn.1
$region0: #{dense_image_vae_with_bn.1}
  #allocation0 [shape = 'u32[]', space=smem, size = 0x4, offset = 0x4, fixed_abs, tag = 'smem constant byte address 0x4 - core index']
  #allocation1 [shape = 'u32[72,128]{1,0:T(1,128)}', space=vmem, size = 0x9000, scoped, tag = 'internal scratch']
  %s0 = inlined_call_operand.vmem [shape: f32[8,256], index: 0, kind: input, shape index: {}]
  %s1 = inlined_call_operand.vmem [shape: f32[8,128], index: 1, kind: input, shape index: {}]
  %s2 = inlined_call_operand.hbm [shape: f32[256,128], index: 2, kind: input, shape index: {}]
  %s3 = inlined_call_operand.vmem [shape: f32[128,128], index: 3, kind: input, shape index: {}]
  %s4 = inlined_call_operand.hbm [shape: f32[128,256], index: 4, kind: input, shape index: {}]
  %s5 = inlined_call_operand.hbm [shape: f32[128,128], index: 5, kind: input, shape index: {}]
  %s6 = inlined_call_operand.hbm [shape: f32[128,128], index: 6, kind: input, shape index: {}]
  %s7 = inlined_call_operand.hbm [shape: f32[128,256], index: 7, kind: input, shape index: {}]
  %s8 = inlined_call_operand.vmem [shape: f32[1,1536], index: 8, kind: input, shape index: {}]
  %s9 = inlined_call_operand.vmem [shape: f32[8,256], index: 9, kind: output, shape index: {0}]
  %s10 = inlined_call_operand.vmem [shape: f32[8,256], index: 10, kind: output, shape index: {1}]
  %11 = xla_tuple %s9, %s10
  %s12 = sld [smem:[#allocation0]]
  $region74: #{dense_image_vae_with_bn.1} parent=0
    _
  %s14 = ssub.s32 1, %s12
  %s15 = scalar_select 0, %s14, %s12
  $region1: #{dense_image_vae_with_bn.1} parent=0
    #allocation2 [shape = 'u8[131072]{0}', space=vmem, size = 0x20000, scoped, tag = 'input window, operand 2, single buffered']
    #allocation3 [shape = 's32[1]{0}', space=sflag, size = 0x4, scoped, tag = 'scoped memory for dense_image_vae_with_bn.1']
    #allocation4 [shape = 'u8[131072]{0}', space=vmem, size = 0x20000, scoped, tag = 'input window, operand 4, single buffered']
    #allocation5 [shape = 's32[1]{0}', space=sflag, size = 0x4, scoped, tag = 'scoped memory for dense_image_vae_with_bn.1']
    #allocation6 [shape = 'u8[65536]{0}', space=vmem, size = 0x10000, scoped, tag = 'input window, operand 5, single buffered']
    #allocation7 [shape = 'u8[65536]{0}', space=vmem, size = 0x10000, scoped, tag = 'input window, operand 6, single buffered']
    #allocation8 [shape = 's32[1]{0}', space=sflag, size = 0x4, scoped, tag = 'scoped memory for dense_image_vae_with_bn.1']
    #allocation9 [shape = 'u8[131072]{0}', space=vmem, size = 0x20000, scoped, tag = 'input window, operand 7, single buffered']
    %16 = vsyncpa [#allocation3], 0
    %17 = vsyncpa [#allocation5], 0
    %18 = vsyncpa [#allocation8], 0
    // Predicated region
    $region2: #{dense_image_vae_with_bn.1} parent=1 // pred_check
      _
    $region3: #{dense_image_vae_with_bn.1} parent=1 // pred_check_branch
      %20 = sbr.rel (0) target = $region5
    $region4: #{dense_image_vae_with_bn.1} parent=1 // pred_region
      _
    $region5: #{dense_image_vae_with_bn.1} parent=1 // pred_fallthru
      _
    // Predicated region
    $region6: #{dense_image_vae_with_bn.1} parent=1 // pred_check
      _
    $region7: #{dense_image_vae_with_bn.1} parent=1 // pred_check_branch
      %22 = sbr.rel (0) target = $region9
    $region8: #{dense_image_vae_with_bn.1} parent=1 // pred_region
      _
    $region9: #{dense_image_vae_with_bn.1} parent=1 // pred_fallthru
      _
    // Predicated region
    $region10: #{dense_image_vae_with_bn.1} parent=1 // pred_check
      _
    $region11: #{dense_image_vae_with_bn.1} parent=1 // pred_check_branch
      %24 = sbr.rel (0) target = $region13
    $region12: #{dense_image_vae_with_bn.1} parent=1 // pred_region
      %26 = vsyncadd [#allocation3], 0
      %s27 = sshll.u32 %s2, 4
      %s28 = int_to_ptr.hbm [resolvable:$true] %s27
      %s29 = sshll.u32 [#allocation2], 4
      %s30 = int_to_ptr.vmem [resolvable:$true] %s29
      %35 = dma.hbm_to_vmem [thread:$0]  %s28, 4096, %s30, [#allocation3], 128, 128, 8
    $region13: #{dense_image_vae_with_bn.1} parent=1 // pred_fallthru
      _
    // Predicated region
    $region14: #{dense_image_vae_with_bn.1} parent=1 // pred_check
      _
    $region15: #{dense_image_vae_with_bn.1} parent=1 // pred_check_branch
      %37 = sbr.rel (0) target = $region17
    $region16: #{dense_image_vae_with_bn.1} parent=1 // pred_region
      _
    $region17: #{dense_image_vae_with_bn.1} parent=1 // pred_fallthru
      _
    // Predicated region
    $region18: #{dense_image_vae_with_bn.1} parent=1 // pred_check
      _
    $region19: #{dense_image_vae_with_bn.1} parent=1 // pred_check_branch
      %39 = sbr.rel (0) target = $region21
    $region20: #{dense_image_vae_with_bn.1} parent=1 // pred_region
      %41 = vsyncadd [#allocation5], 0
      %s42 = sshll.u32 %s4, 4
      %s43 = int_to_ptr.hbm [resolvable:$true] %s42
      %s44 = sshll.u32 [#allocation4], 4
      %s45 = int_to_ptr.vmem [resolvable:$true] %s44
      %50 = dma.hbm_to_vmem [thread:$0]  %s43, 4096, %s45, [#allocation5], 256, 256, 16
    $region21: #{dense_image_vae_with_bn.1} parent=1 // pred_fallthru
      _
    // Predicated region
    $region22: #{dense_image_vae_with_bn.1} parent=1 // pred_check
      _
    $region23: #{dense_image_vae_with_bn.1} parent=1 // pred_check_branch
      %52 = sbr.rel (0) target = $region25
    $region24: #{dense_image_vae_with_bn.1} parent=1 // pred_region
      %54 = vsyncadd [#allocation5], 0
      %s55 = sshll.u32 %s5, 4
      %s56 = int_to_ptr.hbm [resolvable:$true] %s55
      %s57 = sshll.u32 [#allocation6], 4
      %s58 = int_to_ptr.vmem [resolvable:$true] %s57
      %63 = dma.hbm_to_vmem [thread:$0]  %s56, 2048, %s58, [#allocation5], 128, 128, 8
    $region25: #{dense_image_vae_with_bn.1} parent=1 // pred_fallthru
      _
    // Predicated region
    $region26: #{dense_image_vae_with_bn.1} parent=1 // pred_check
      _
    $region27: #{dense_image_vae_with_bn.1} parent=1 // pred_check_branch
      %65 = sbr.rel (0) target = $region29
    $region28: #{dense_image_vae_with_bn.1} parent=1 // pred_region
      %67 = vsyncadd [#allocation8], 0
      %s68 = sshll.u32 %s6, 4
      %s69 = int_to_ptr.hbm [resolvable:$true] %s68
      %s70 = sshll.u32 [#allocation7], 4
      %s71 = int_to_ptr.vmem [resolvable:$true] %s70
      %76 = dma.hbm_to_vmem [thread:$0]  %s69, 2048, %s71, [#allocation8], 128, 128, 8
    $region29: #{dense_image_vae_with_bn.1} parent=1 // pred_fallthru
      _
    // Predicated region
    $region30: #{dense_image_vae_with_bn.1} parent=1 // pred_check
      _
    $region31: #{dense_image_vae_with_bn.1} parent=1 // pred_check_branch
      %78 = sbr.rel (0) target = $region33
    $region32: #{dense_image_vae_with_bn.1} parent=1 // pred_region
      %80 = vsyncadd [#allocation8], 0
      %s81 = sshll.u32 %s7, 4
      %s82 = int_to_ptr.hbm [resolvable:$true] %s81
      %s83 = sshll.u32 [#allocation9], 4
      %s84 = int_to_ptr.vmem [resolvable:$true] %s83
      %89 = dma.hbm_to_vmem [thread:$0]  %s82, 4096, %s84, [#allocation8], 256, 256, 16
    $region33: #{dense_image_vae_with_bn.1} parent=1 // pred_fallthru
      _
    // Predicated region
    $region34: #{dense_image_vae_with_bn.1} parent=1 // pred_check
      _
    $region35: #{dense_image_vae_with_bn.1} parent=1 // pred_check_branch
      %91 = sbr.rel (0) target = $region37
    $region36: #{dense_image_vae_with_bn.1} parent=1 // pred_region
      _
    $region37: #{dense_image_vae_with_bn.1} parent=1 // pred_fallthru
      _
    // Predicated region
    $region38: #{dense_image_vae_with_bn.1} parent=1 // pred_check
      _
    $region39: #{dense_image_vae_with_bn.1} parent=1 // pred_check_branch
      %93 = sbr.rel (0) target = $region41
    $region40: #{dense_image_vae_with_bn.1} parent=1 // pred_region
      %95 = dma.done [#allocation3], 4096
    $region41: #{dense_image_vae_with_bn.1} parent=1 // pred_fallthru
      _
    // Predicated region
    $region42: #{dense_image_vae_with_bn.1} parent=1 // pred_check
      _
    $region43: #{dense_image_vae_with_bn.1} parent=1 // pred_check_branch
      %97 = sbr.rel (0) target = $region45
    $region44: #{dense_image_vae_with_bn.1} parent=1 // pred_region
      %99 = dma.done [#allocation5], 4096
    $region45: #{dense_image_vae_with_bn.1} parent=1 // pred_fallthru
      _
    // Predicated region
    $region46: #{dense_image_vae_with_bn.1} parent=1 // pred_check
      _
    $region47: #{dense_image_vae_with_bn.1} parent=1 // pred_check_branch
      %101 = sbr.rel (0) target = $region49
    $region48: #{dense_image_vae_with_bn.1} parent=1 // pred_region
      %103 = dma.done [#allocation5], 2048
    $region49: #{dense_image_vae_with_bn.1} parent=1 // pred_fallthru
      _
    // Predicated region
    $region50: #{dense_image_vae_with_bn.1} parent=1 // pred_check
      _
    $region51: #{dense_image_vae_with_bn.1} parent=1 // pred_check_branch
      %105 = sbr.rel (0) target = $region53
    $region52: #{dense_image_vae_with_bn.1} parent=1 // pred_region
      %107 = dma.done [#allocation8], 2048
    $region53: #{dense_image_vae_with_bn.1} parent=1 // pred_fallthru
      _
    // Predicated region
    $region54: #{dense_image_vae_with_bn.1} parent=1 // pred_check
      _
    $region55: #{dense_image_vae_with_bn.1} parent=1 // pred_check_branch
      %109 = sbr.rel (0) target = $region57
    $region56: #{dense_image_vae_with_bn.1} parent=1 // pred_region
      %111 = dma.done [#allocation8], 4096
    $region57: #{dense_image_vae_with_bn.1} parent=1 // pred_fallthru
      _
    %v112 = vld [vmem:[%s0] sm:$0xff]
    %v113 = vld [vmem:[%s0 + $0x8] sm:$0xff]
    %v114 = vld [vmem:[#allocation2] sm:$0xff]
    %v115 = vld [vmem:[#allocation2 + $0x8] sm:$0xff]
    %v116 = vld [vmem:[#allocation2 + $0x10] sm:$0xff]
    %v117 = vld [vmem:[#allocation2 + $0x18] sm:$0xff]
    %v118 = vld [vmem:[#allocation2 + $0x20] sm:$0xff]
    %v119 = vld [vmem:[#allocation2 + $0x28] sm:$0xff]
    %v120 = vld [vmem:[#allocation2 + $0x30] sm:$0xff]
    %v121 = vld [vmem:[#allocation2 + $0x38] sm:$0xff]
    %v122 = vld [vmem:[#allocation2 + $0x40] sm:$0xff]
    %v123 = vld [vmem:[#allocation2 + $0x48] sm:$0xff]
    %v124 = vld [vmem:[#allocation2 + $0x50] sm:$0xff]
    %v125 = vld [vmem:[#allocation2 + $0x58] sm:$0xff]
    %v126 = vld [vmem:[#allocation2 + $0x60] sm:$0xff]
    %v127 = vld [vmem:[#allocation2 + $0x68] sm:$0xff]
    %v128 = vld [vmem:[#allocation2 + $0x70] sm:$0xff]
    %v129 = vld [vmem:[#allocation2 + $0x78] sm:$0xff]
    %v130 = vld [vmem:[#allocation2 + $0x80] sm:$0xff]
    %v131 = vld [vmem:[#allocation2 + $0x88] sm:$0xff]
    %v132 = vld [vmem:[#allocation2 + $0x90] sm:$0xff]
    %v133 = vld [vmem:[#allocation2 + $0x98] sm:$0xff]
    %v134 = vld [vmem:[#allocation2 + $0xa0] sm:$0xff]
    %v135 = vld [vmem:[#allocation2 + $0xa8] sm:$0xff]
    %v136 = vld [vmem:[#allocation2 + $0xb0] sm:$0xff]
    %v137 = vld [vmem:[#allocation2 + $0xb8] sm:$0xff]
    %v138 = vld [vmem:[#allocation2 + $0xc0] sm:$0xff]
    %v139 = vld [vmem:[#allocation2 + $0xc8] sm:$0xff]
    %v140 = vld [vmem:[#allocation2 + $0xd0] sm:$0xff]
    %v141 = vld [vmem:[#allocation2 + $0xd8] sm:$0xff]
    %v142 = vld [vmem:[#allocation2 + $0xe0] sm:$0xff]
    %v143 = vld [vmem:[#allocation2 + $0xe8] sm:$0xff]
    %v144 = vld [vmem:[#allocation2 + $0xf0] sm:$0xff]
    %v145 = vld [vmem:[#allocation2 + $0xf8] sm:$0xff]
    %146 = vmatpush.msra.mxu0 %v129
    %147 = vmatpush.msra.mxu0 %v128
    %148 = vmatpush.msra.mxu0 %v127
    %149 = vmatpush.msra.mxu0 %v126
    %150 = vmatpush.msra.mxu0 %v125
    %151 = vmatpush.msra.mxu0 %v124
    %152 = vmatpush.msra.mxu0 %v123
    %153 = vmatpush.msra.mxu0 %v122
    %154 = vmatpush.msra.mxu0 %v121
    %155 = vmatpush.msra.mxu0 %v120
    %156 = vmatpush.msra.mxu0 %v119
    %157 = vmatpush.msra.mxu0 %v118
    %158 = vmatpush.msra.mxu0 %v117
    %159 = vmatpush.msra.mxu0 %v116
    %160 = vmatpush.msra.mxu0 %v115
    %161 = vmatpush.msra.mxu0 %v114
    %162 = vmatmul.f32.gmra.mxu0 %v112
    %v163 = vpop.f32.mrf.mxu0
    %v164 = vadd.f32 0.0, %v163
    %165 = vdwg.mxu0
    %166 = vmatpush.msra.mxu0 %v145
    %167 = vmatpush.msra.mxu0 %v144
    %168 = vmatpush.msra.mxu0 %v143
    %169 = vmatpush.msra.mxu0 %v142
    %170 = vmatpush.msra.mxu0 %v141
    %171 = vmatpush.msra.mxu0 %v140
    %172 = vmatpush.msra.mxu0 %v139
    %173 = vmatpush.msra.mxu0 %v138
    %174 = vmatpush.msra.mxu0 %v137
    %175 = vmatpush.msra.mxu0 %v136
    %176 = vmatpush.msra.mxu0 %v135
    %177 = vmatpush.msra.mxu0 %v134
    %178 = vmatpush.msra.mxu0 %v133
    %179 = vmatpush.msra.mxu0 %v132
    %180 = vmatpush.msra.mxu0 %v131
    %181 = vmatpush.msra.mxu0 %v130
    %182 = vmatmul.f32.gmra.mxu0 %v113
    %v183 = vpop.f32.mrf.mxu0
    %v184 = vadd.f32 %v164, %v183
    %185 = vdwg.mxu0
    %v186 = vld [vmem:[%s8] sm:$0x1]
    %v187 = vld [vmem:[%s8 + $0x1] sm:$0x1]
    %v188 = vrot.slane %v184, 4
    %v189 = vadd.f32 %v184, %v188
    %v190 = vrot.slane %v189, 2
    %v191 = vadd.f32 %v189, %v190
    %v192 = vrot.slane %v191, 1
    %v193 = vadd.f32 %v191, %v192
    %v194 = vrcp.pop 8.0
    %v195 = vmul.f32 8.0, %v194
    %v196 = vsub.f32 1.0, %v195
    %v197 = vmul.f32 %v194, %v196
    %v198 = vadd.f32 %v194, %v197
    %vm199 = vweird.f32 %v194
    %v200 = vsel %vm199, %v194, %v198
    %v201 = vmul.f32 %v193, %v200
    %v202 = vmul.f32 %v184, %v184
    %v203 = vrot.slane %v202, 4
    %v204 = vadd.f32 %v202, %v203
    %v205 = vrot.slane %v204, 2
    %v206 = vadd.f32 %v204, %v205
    %v207 = vrot.slane %v206, 1
    %v208 = vadd.f32 %v206, %v207
    %v209 = vmul.f32 %v208, %v200
    %v210 = vmul.f32 %v201, %v201
    %v211 = vsub.f32 %v209, %v210
    %v212 = vmax.f32 %v211, 0.0
    %v213 = vadd.f32 %v212, 1e-05
    %v214 = vrsqrt.pop %v213
    %v215 = vmul.f32 %v214, %v213
    %v216 = vmul.f32 %v215, %v214
    %v217 = vmul.f32 0.5, %v216
    %v218 = vsub.f32 1.5, %v217
    %v219 = vmul.f32 %v214, %v218
    %vm220 = vweird.f32 %v213
    %vm221 = vweird.f32 %v214
    %vm222 = vmor %vm220, %vm221
    %v223 = vsel %vm222, %v214, %v219
    %v224 = vmul.f32 %v186, %v223
    %v225 = vmul.f32 %v201, %v224
    %v226 = vsub.f32 %v187, %v225
    %v228 = vperm.slane %v224, 0
    %v230 = vmul.f32 %v184, %v228
    %v232 = vperm.slane %v226, 0
    %v234 = vadd.f32 %v230, %v232
    %v235 = vmax.f32 %v234, 0.0
    %v236 = vld [vmem:[%s3] sm:$0xff]
    %v237 = vld [vmem:[%s3 + $0x8] sm:$0xff]
    %v238 = vld [vmem:[%s3 + $0x10] sm:$0xff]
    %v239 = vld [vmem:[%s3 + $0x18] sm:$0xff]
    %v240 = vld [vmem:[%s3 + $0x20] sm:$0xff]
    %v241 = vld [vmem:[%s3 + $0x28] sm:$0xff]
    %v242 = vld [vmem:[%s3 + $0x30] sm:$0xff]
    %v243 = vld [vmem:[%s3 + $0x38] sm:$0xff]
    %v244 = vld [vmem:[%s3 + $0x40] sm:$0xff]
    %v245 = vld [vmem:[%s3 + $0x48] sm:$0xff]
    %v246 = vld [vmem:[%s3 + $0x50] sm:$0xff]
    %v247 = vld [vmem:[%s3 + $0x58] sm:$0xff]
    %v248 = vld [vmem:[%s3 + $0x60] sm:$0xff]
    %v249 = vld [vmem:[%s3 + $0x68] sm:$0xff]
    %v250 = vld [vmem:[%s3 + $0x70] sm:$0xff]
    %v251 = vld [vmem:[%s3 + $0x78] sm:$0xff]
    %252 = vmatpush.msra.mxu0 %v251
    %253 = vmatpush.msra.mxu0 %v250
    %254 = vmatpush.msra.mxu0 %v249
    %255 = vmatpush.msra.mxu0 %v248
    %256 = vmatpush.msra.mxu0 %v247
    %257 = vmatpush.msra.mxu0 %v246
    %258 = vmatpush.msra.mxu0 %v245
    %259 = vmatpush.msra.mxu0 %v244
    %260 = vmatpush.msra.mxu0 %v243
    %261 = vmatpush.msra.mxu0 %v242
    %262 = vmatpush.msra.mxu0 %v241
    %263 = vmatpush.msra.mxu0 %v240
    %264 = vmatpush.msra.mxu0 %v239
    %265 = vmatpush.msra.mxu0 %v238
    %266 = vmatpush.msra.mxu0 %v237
    %267 = vmatpush.msra.mxu0 %v236
    %268 = vmatmul.f32.gmra.mxu0 %v235
    %v269 = vpop.f32.mrf.mxu0
    %v270 = vadd.f32 0.0, %v269
    %271 = vdwg.mxu0
    %v272 = vld [vmem:[%s8 + $0x2] sm:$0x1]
    %v273 = vld [vmem:[%s8 + $0x3] sm:$0x1]
    %v274 = vrot.slane %v270, 4
    %v275 = vadd.f32 %v270, %v274
    %v276 = vrot.slane %v275, 2
    %v277 = vadd.f32 %v275, %v276
    %v278 = vrot.slane %v277, 1
    %v279 = vadd.f32 %v277, %v278
    %v280 = vmul.f32 %v279, %v200
    %v281 = vmul.f32 %v270, %v270
    %v282 = vrot.slane %v281, 4
    %v283 = vadd.f32 %v281, %v282
    %v284 = vrot.slane %v283, 2
    %v285 = vadd.f32 %v283, %v284
    %v286 = vrot.slane %v285, 1
    %v287 = vadd.f32 %v285, %v286
    %v288 = vmul.f32 %v287, %v200
    %v289 = vmul.f32 %v280, %v280
    %v290 = vsub.f32 %v288, %v289
    %v291 = vmax.f32 %v290, 0.0
    %v292 = vadd.f32 %v291, 1e-05
    %v293 = vrsqrt.pop %v292
    %v294 = vmul.f32 %v293, %v292
    %v295 = vmul.f32 %v294, %v293
    %v296 = vmul.f32 0.5, %v295
    %v297 = vsub.f32 1.5, %v296
    %v298 = vmul.f32 %v293, %v297
    %vm299 = vweird.f32 %v292
    %vm300 = vweird.f32 %v293
    %vm301 = vmor %vm299, %vm300
    %v302 = vsel %vm301, %v293, %v298
    %v303 = vmul.f32 %v272, %v302
    %v304 = vmul.f32 %v280, %v303
    %v305 = vsub.f32 %v273, %v304
    %v307 = vperm.slane %v303, 0
    %v309 = vmul.f32 %v270, %v307
    %v311 = vperm.slane %v305, 0
    %v313 = vadd.f32 %v309, %v311
    %v314 = vmax.f32 %v313, 0.0
    %v315 = vld [vmem:[#allocation4] sm:$0xff]
    %v316 = vld [vmem:[#allocation4 + $0x8] sm:$0xff]
    %v317 = vld [vmem:[#allocation4 + $0x10] sm:$0xff]
    %v318 = vld [vmem:[#allocation4 + $0x18] sm:$0xff]
    %v319 = vld [vmem:[#allocation4 + $0x20] sm:$0xff]
    %v320 = vld [vmem:[#allocation4 + $0x28] sm:$0xff]
    %v321 = vld [vmem:[#allocation4 + $0x30] sm:$0xff]
    %v322 = vld [vmem:[#allocation4 + $0x38] sm:$0xff]
    %v323 = vld [vmem:[#allocation4 + $0x40] sm:$0xff]
    %v324 = vld [vmem:[#allocation4 + $0x48] sm:$0xff]
    %v325 = vld [vmem:[#allocation4 + $0x50] sm:$0xff]
    %v326 = vld [vmem:[#allocation4 + $0x58] sm:$0xff]
    %v327 = vld [vmem:[#allocation4 + $0x60] sm:$0xff]
    %v328 = vld [vmem:[#allocation4 + $0x68] sm:$0xff]
    %v329 = vld [vmem:[#allocation4 + $0x70] sm:$0xff]
    %v330 = vld [vmem:[#allocation4 + $0x78] sm:$0xff]
    %v331 = vld [vmem:[#allocation4 + $0x80] sm:$0xff]
    %v332 = vld [vmem:[#allocation4 + $0x88] sm:$0xff]
    %v333 = vld [vmem:[#allocation4 + $0x90] sm:$0xff]
    %v334 = vld [vmem:[#allocation4 + $0x98] sm:$0xff]
    %v335 = vld [vmem:[#allocation4 + $0xa0] sm:$0xff]
    %v336 = vld [vmem:[#allocation4 + $0xa8] sm:$0xff]
    %v337 = vld [vmem:[#allocation4 + $0xb0] sm:$0xff]
    %v338 = vld [vmem:[#allocation4 + $0xb8] sm:$0xff]
    %v339 = vld [vmem:[#allocation4 + $0xc0] sm:$0xff]
    %v340 = vld [vmem:[#allocation4 + $0xc8] sm:$0xff]
    %v341 = vld [vmem:[#allocation4 + $0xd0] sm:$0xff]
    %v342 = vld [vmem:[#allocation4 + $0xd8] sm:$0xff]
    %v343 = vld [vmem:[#allocation4 + $0xe0] sm:$0xff]
    %v344 = vld [vmem:[#allocation4 + $0xe8] sm:$0xff]
    %v345 = vld [vmem:[#allocation4 + $0xf0] sm:$0xff]
    %v346 = vld [vmem:[#allocation4 + $0xf8] sm:$0xff]
    %v347 = vld [vmem:[%s8 + $0x8] sm:$0x3]
    %v349 = vperm.slane %v347, 0
    %v350 = vperm.slane %v347, 1
    %353 = vmatpush.msra.mxu0 %v345
    %354 = vmatpush.msra.mxu0 %v343
    %355 = vmatpush.msra.mxu0 %v341
    %356 = vmatpush.msra.mxu0 %v339
    %357 = vmatpush.msra.mxu0 %v337
    %358 = vmatpush.msra.mxu0 %v335
    %359 = vmatpush.msra.mxu0 %v333
    %360 = vmatpush.msra.mxu0 %v331
    %361 = vmatpush.msra.mxu0 %v329
    %362 = vmatpush.msra.mxu0 %v327
    %363 = vmatpush.msra.mxu0 %v325
    %364 = vmatpush.msra.mxu0 %v323
    %365 = vmatpush.msra.mxu0 %v321
    %366 = vmatpush.msra.mxu0 %v319
    %367 = vmatpush.msra.mxu0 %v317
    %368 = vmatpush.msra.mxu0 %v315
    %369 = vmatmul.f32.gmra.mxu0 %v314
    %v370 = vpop.f32.mrf.mxu0
    %v371 = vadd.f32 %v349, %v370
    %372 = vdwg.mxu0
    %373 = vmatpush.msra.mxu0 %v346
    %374 = vmatpush.msra.mxu0 %v344
    %375 = vmatpush.msra.mxu0 %v342
    %376 = vmatpush.msra.mxu0 %v340
    %377 = vmatpush.msra.mxu0 %v338
    %378 = vmatpush.msra.mxu0 %v336
    %379 = vmatpush.msra.mxu0 %v334
    %380 = vmatpush.msra.mxu0 %v332
    %381 = vmatpush.msra.mxu0 %v330
    %382 = vmatpush.msra.mxu0 %v328
    %383 = vmatpush.msra.mxu0 %v326
    %384 = vmatpush.msra.mxu0 %v324
    %385 = vmatpush.msra.mxu0 %v322
    %386 = vmatpush.msra.mxu0 %v320
    %387 = vmatpush.msra.mxu0 %v318
    %388 = vmatpush.msra.mxu0 %v316
    %389 = vmatmul.f32.gmra.mxu0 %v314
    %v390 = vpop.f32.mrf.mxu0
    %v391 = vadd.f32 %v350, %v390
    %392 = vdwg.mxu0
    %v393 = vld [vmem:[%s1] sm:$0xff]
    %v394 = vmul.f32 %v391, 0.5
    %v395 = vmul.f32 %v394, 1.442695
    %v396 = vpow.pop %v395
    %v397 = vmul.f32 %v393, %v396
    %v398 = vadd.f32 %v371, %v397
    %v399 = vld [vmem:[#allocation6] sm:$0xff]
    %v400 = vld [vmem:[#allocation6 + $0x8] sm:$0xff]
    %v401 = vld [vmem:[#allocation6 + $0x10] sm:$0xff]
    %v402 = vld [vmem:[#allocation6 + $0x18] sm:$0xff]
    %v403 = vld [vmem:[#allocation6 + $0x20] sm:$0xff]
    %v404 = vld [vmem:[#allocation6 + $0x28] sm:$0xff]
    %v405 = vld [vmem:[#allocation6 + $0x30] sm:$0xff]
    %v406 = vld [vmem:[#allocation6 + $0x38] sm:$0xff]
    %v407 = vld [vmem:[#allocation6 + $0x40] sm:$0xff]
    %v408 = vld [vmem:[#allocation6 + $0x48] sm:$0xff]
    %v409 = vld [vmem:[#allocation6 + $0x50] sm:$0xff]
    %v410 = vld [vmem:[#allocation6 + $0x58] sm:$0xff]
    %v411 = vld [vmem:[#allocation6 + $0x60] sm:$0xff]
    %v412 = vld [vmem:[#allocation6 + $0x68] sm:$0xff]
    %v413 = vld [vmem:[#allocation6 + $0x70] sm:$0xff]
    %v414 = vld [vmem:[#allocation6 + $0x78] sm:$0xff]
    %415 = vmatpush.msra.mxu0 %v414
    %416 = vmatpush.msra.mxu0 %v413
    %417 = vmatpush.msra.mxu0 %v412
    %418 = vmatpush.msra.mxu0 %v411
    %419 = vmatpush.msra.mxu0 %v410
    %420 = vmatpush.msra.mxu0 %v409
    %421 = vmatpush.msra.mxu0 %v408
    %422 = vmatpush.msra.mxu0 %v407
    %423 = vmatpush.msra.mxu0 %v406
    %424 = vmatpush.msra.mxu0 %v405
    %425 = vmatpush.msra.mxu0 %v404
    %426 = vmatpush.msra.mxu0 %v403
    %427 = vmatpush.msra.mxu0 %v402
    %428 = vmatpush.msra.mxu0 %v401
    %429 = vmatpush.msra.mxu0 %v400
    %430 = vmatpush.msra.mxu0 %v399
    %431 = vmatmul.f32.gmra.mxu0 %v398
    %v432 = vpop.f32.mrf.mxu0
    %v433 = vadd.f32 0.0, %v432
    %434 = vdwg.mxu0
    %v435 = vld [vmem:[%s8 + $0x4] sm:$0x1]
    %v436 = vld [vmem:[%s8 + $0x5] sm:$0x1]
    %v437 = vrot.slane %v433, 4
    %v438 = vadd.f32 %v433, %v437
    %v439 = vrot.slane %v438, 2
    %v440 = vadd.f32 %v438, %v439
    %v441 = vrot.slane %v440, 1
    %v442 = vadd.f32 %v440, %v441
    %v443 = vmul.f32 %v442, %v200
    %v444 = vmul.f32 %v433, %v433
    %v445 = vrot.slane %v444, 4
    %v446 = vadd.f32 %v444, %v445
    %v447 = vrot.slane %v446, 2
    %v448 = vadd.f32 %v446, %v447
    %v449 = vrot.slane %v448, 1
    %v450 = vadd.f32 %v448, %v449
    %v451 = vmul.f32 %v450, %v200
    %v452 = vmul.f32 %v443, %v443
    %v453 = vsub.f32 %v451, %v452
    %v454 = vmax.f32 %v453, 0.0
    %v455 = vadd.f32 %v454, 1e-05
    %v456 = vrsqrt.pop %v455
    %v457 = vmul.f32 %v456, %v455
    %v458 = vmul.f32 %v457, %v456
    %v459 = vmul.f32 0.5, %v458
    %v460 = vsub.f32 1.5, %v459
    %v461 = vmul.f32 %v456, %v460
    %vm462 = vweird.f32 %v455
    %vm463 = vweird.f32 %v456
    %vm464 = vmor %vm462, %vm463
    %v465 = vsel %vm464, %v456, %v461
    %v466 = vmul.f32 %v435, %v465
    %v467 = vmul.f32 %v443, %v466
    %v468 = vsub.f32 %v436, %v467
    %v470 = vperm.slane %v466, 0
    %v472 = vmul.f32 %v433, %v470
    %v474 = vperm.slane %v468, 0
    %v476 = vadd.f32 %v472, %v474
    %v477 = vmax.f32 %v476, 0.0
    %v478 = vld [vmem:[#allocation7] sm:$0xff]
    %v479 = vld [vmem:[#allocation7 + $0x8] sm:$0xff]
    %v480 = vld [vmem:[#allocation7 + $0x10] sm:$0xff]
    %v481 = vld [vmem:[#allocation7 + $0x18] sm:$0xff]
    %v482 = vld [vmem:[#allocation7 + $0x20] sm:$0xff]
    %v483 = vld [vmem:[#allocation7 + $0x28] sm:$0xff]
    %v484 = vld [vmem:[#allocation7 + $0x30] sm:$0xff]
    %v485 = vld [vmem:[#allocation7 + $0x38] sm:$0xff]
    %v486 = vld [vmem:[#allocation7 + $0x40] sm:$0xff]
    %v487 = vld [vmem:[#allocation7 + $0x48] sm:$0xff]
    %v488 = vld [vmem:[#allocation7 + $0x50] sm:$0xff]
    %v489 = vld [vmem:[#allocation7 + $0x58] sm:$0xff]
    %v490 = vld [vmem:[#allocation7 + $0x60] sm:$0xff]
    %v491 = vld [vmem:[#allocation7 + $0x68] sm:$0xff]
    %v492 = vld [vmem:[#allocation7 + $0x70] sm:$0xff]
    %v493 = vld [vmem:[#allocation7 + $0x78] sm:$0xff]
    %494 = vmatpush.msra.mxu0 %v493
    %495 = vmatpush.msra.mxu0 %v492
    %496 = vmatpush.msra.mxu0 %v491
    %497 = vmatpush.msra.mxu0 %v490
    %498 = vmatpush.msra.mxu0 %v489
    %499 = vmatpush.msra.mxu0 %v488
    %500 = vmatpush.msra.mxu0 %v487
    %501 = vmatpush.msra.mxu0 %v486
    %502 = vmatpush.msra.mxu0 %v485
    %503 = vmatpush.msra.mxu0 %v484
    %504 = vmatpush.msra.mxu0 %v483
    %505 = vmatpush.msra.mxu0 %v482
    %506 = vmatpush.msra.mxu0 %v481
    %507 = vmatpush.msra.mxu0 %v480
    %508 = vmatpush.msra.mxu0 %v479
    %509 = vmatpush.msra.mxu0 %v478
    %510 = vmatmul.f32.gmra.mxu0 %v477
    %v511 = vpop.f32.mrf.mxu0
    %v512 = vadd.f32 0.0, %v511
    %513 = vdwg.mxu0
    %v514 = vld [vmem:[%s8 + $0x6] sm:$0x1]
    %v515 = vld [vmem:[%s8 + $0x7] sm:$0x1]
    %v516 = vrot.slane %v512, 4
    %v517 = vadd.f32 %v512, %v516
    %v518 = vrot.slane %v517, 2
    %v519 = vadd.f32 %v517, %v518
    %v520 = vrot.slane %v519, 1
    %v521 = vadd.f32 %v519, %v520
    %v522 = vmul.f32 %v521, %v200
    %v523 = vmul.f32 %v512, %v512
    %v524 = vrot.slane %v523, 4
    %v525 = vadd.f32 %v523, %v524
    %v526 = vrot.slane %v525, 2
    %v527 = vadd.f32 %v525, %v526
    %v528 = vrot.slane %v527, 1
    %v529 = vadd.f32 %v527, %v528
    %v530 = vmul.f32 %v529, %v200
    %v531 = vmul.f32 %v522, %v522
    %v532 = vsub.f32 %v530, %v531
    %v533 = vmax.f32 %v532, 0.0
    %v534 = vadd.f32 %v533, 1e-05
    %v535 = vrsqrt.pop %v534
    %v536 = vmul.f32 %v535, %v534
    %v537 = vmul.f32 %v536, %v535
    %v538 = vmul.f32 0.5, %v537
    %v539 = vsub.f32 1.5, %v538
    %v540 = vmul.f32 %v535, %v539
    %vm541 = vweird.f32 %v534
    %vm542 = vweird.f32 %v535
    %vm543 = vmor %vm541, %vm542
    %v544 = vsel %vm543, %v535, %v540
    %v545 = vmul.f32 %v514, %v544
    %v546 = vmul.f32 %v522, %v545
    %v547 = vsub.f32 %v515, %v546
    %v549 = vperm.slane %v545, 0
    %v551 = vmul.f32 %v512, %v549
    %v553 = vperm.slane %v547, 0
    %v555 = vadd.f32 %v551, %v553
    %v556 = vmax.f32 %v555, 0.0
    %v557 = vld [vmem:[#allocation9] sm:$0xff]
    %v558 = vld [vmem:[#allocation9 + $0x8] sm:$0xff]
    %v559 = vld [vmem:[#allocation9 + $0x10] sm:$0xff]
    %v560 = vld [vmem:[#allocation9 + $0x18] sm:$0xff]
    %v561 = vld [vmem:[#allocation9 + $0x20] sm:$0xff]
    %v562 = vld [vmem:[#allocation9 + $0x28] sm:$0xff]
    %v563 = vld [vmem:[#allocation9 + $0x30] sm:$0xff]
    %v564 = vld [vmem:[#allocation9 + $0x38] sm:$0xff]
    %v565 = vld [vmem:[#allocation9 + $0x40] sm:$0xff]
    %v566 = vld [vmem:[#allocation9 + $0x48] sm:$0xff]
    %v567 = vld [vmem:[#allocation9 + $0x50] sm:$0xff]
    %v568 = vld [vmem:[#allocation9 + $0x58] sm:$0xff]
    %v569 = vld [vmem:[#allocation9 + $0x60] sm:$0xff]
    %v570 = vld [vmem:[#allocation9 + $0x68] sm:$0xff]
    %v571 = vld [vmem:[#allocation9 + $0x70] sm:$0xff]
    %v572 = vld [vmem:[#allocation9 + $0x78] sm:$0xff]
    %v573 = vld [vmem:[#allocation9 + $0x80] sm:$0xff]
    %v574 = vld [vmem:[#allocation9 + $0x88] sm:$0xff]
    %v575 = vld [vmem:[#allocation9 + $0x90] sm:$0xff]
    %v576 = vld [vmem:[#allocation9 + $0x98] sm:$0xff]
    %v577 = vld [vmem:[#allocation9 + $0xa0] sm:$0xff]
    %v578 = vld [vmem:[#allocation9 + $0xa8] sm:$0xff]
    %v579 = vld [vmem:[#allocation9 + $0xb0] sm:$0xff]
    %v580 = vld [vmem:[#allocation9 + $0xb8] sm:$0xff]
    %v581 = vld [vmem:[#allocation9 + $0xc0] sm:$0xff]
    %v582 = vld [vmem:[#allocation9 + $0xc8] sm:$0xff]
    %v583 = vld [vmem:[#allocation9 + $0xd0] sm:$0xff]
    %v584 = vld [vmem:[#allocation9 + $0xd8] sm:$0xff]
    %v585 = vld [vmem:[#allocation9 + $0xe0] sm:$0xff]
    %v586 = vld [vmem:[#allocation9 + $0xe8] sm:$0xff]
    %v587 = vld [vmem:[#allocation9 + $0xf0] sm:$0xff]
    %v588 = vld [vmem:[#allocation9 + $0xf8] sm:$0xff]
    %v589 = vld [vmem:[%s8 + $0xa] sm:$0x3]
    %v591 = vperm.slane %v589, 0
    %v592 = vperm.slane %v589, 1
    %595 = vmatpush.msra.mxu0 %v587
    %596 = vmatpush.msra.mxu0 %v585
    %597 = vmatpush.msra.mxu0 %v583
    %598 = vmatpush.msra.mxu0 %v581
    %599 = vmatpush.msra.mxu0 %v579
    %600 = vmatpush.msra.mxu0 %v577
    %601 = vmatpush.msra.mxu0 %v575
    %602 = vmatpush.msra.mxu0 %v573
    %603 = vmatpush.msra.mxu0 %v571
    %604 = vmatpush.msra.mxu0 %v569
    %605 = vmatpush.msra.mxu0 %v567
    %606 = vmatpush.msra.mxu0 %v565
    %607 = vmatpush.msra.mxu0 %v563
    %608 = vmatpush.msra.mxu0 %v561
    %609 = vmatpush.msra.mxu0 %v559
    %610 = vmatpush.msra.mxu0 %v557
    %611 = vmatmul.f32.gmra.mxu0 %v556
    %v612 = vpop.f32.mrf.mxu0
    %v613 = vadd.f32 %v591, %v612
    %614 = vdwg.mxu0
    %615 = vmatpush.msra.mxu0 %v588
    %616 = vmatpush.msra.mxu0 %v586
    %617 = vmatpush.msra.mxu0 %v584
    %618 = vmatpush.msra.mxu0 %v582
    %619 = vmatpush.msra.mxu0 %v580
    %620 = vmatpush.msra.mxu0 %v578
    %621 = vmatpush.msra.mxu0 %v576
    %622 = vmatpush.msra.mxu0 %v574
    %623 = vmatpush.msra.mxu0 %v572
    %624 = vmatpush.msra.mxu0 %v570
    %625 = vmatpush.msra.mxu0 %v568
    %626 = vmatpush.msra.mxu0 %v566
    %627 = vmatpush.msra.mxu0 %v564
    %628 = vmatpush.msra.mxu0 %v562
    %629 = vmatpush.msra.mxu0 %v560
    %630 = vmatpush.msra.mxu0 %v558
    %631 = vmatmul.f32.gmra.mxu0 %v556
    %v632 = vpop.f32.mrf.mxu0
    %v633 = vadd.f32 %v592, %v632
    %634 = vdwg.mxu0
    %v635 = vxor.u32 %v613, 2147483648
    %v636 = vxor.u32 %v633, 2147483648
    %v637 = vmul.f32 %v635, 1.442695
    %v638 = vpow.pop %v637
    %v639 = vmul.f32 %v636, 1.442695
    %v640 = vpow.pop %v639
    %v641 = vadd.f32 %v638, 1.0
    %v642 = vadd.f32 %v640, 1.0
    %v643 = vrcp.pop %v641
    %v644 = vmul.f32 %v641, %v643
    %v645 = vsub.f32 1.0, %v644
    %v646 = vmul.f32 %v643, %v645
    %v647 = vadd.f32 %v643, %v646
    %vm648 = vweird.f32 %v641
    %vm649 = vweird.f32 %v643
    %vm650 = vmor %vm648, %vm649
    %v651 = vsel %vm650, %v643, %v647
    %v652 = vand.u32 2147483647, %v641
    %vm653 = vcmp.eq.f32.partialorder %v652, 8.507059e+37
    %v654 = vand.u32 %v641, 2147483648
    %v655 = vor.u32 1.1754944e-38, %v654
    %v656 = vsel %vm653, %v655, %v651
    %v657 = vmul.f32 1.0, %v656
    %v658 = vrcp.pop %v642
    %v659 = vmul.f32 %v642, %v658
    %v660 = vsub.f32 1.0, %v659
    %v661 = vmul.f32 %v658, %v660
    %v662 = vadd.f32 %v658, %v661
    %vm663 = vweird.f32 %v642
    %vm664 = vweird.f32 %v658
    %vm665 = vmor %vm663, %vm664
    %v666 = vsel %vm665, %v658, %v662
    %v667 = vand.u32 2147483647, %v642
    %vm668 = vcmp.eq.f32.partialorder %v667, 8.507059e+37
    %v669 = vand.u32 %v642, 2147483648
    %v670 = vor.u32 1.1754944e-38, %v669
    %v671 = vsel %vm668, %v670, %v666
    %v672 = vmul.f32 1.0, %v671
    %673 = vst [vmem:[%s9] sm:$0xff] %v657
    %674 = vst [vmem:[%s9 + $0x8] sm:$0xff] %v672
    %675 = vst [vmem:[%s10] sm:$0xff] %v371
    %676 = vst [vmem:[%s10 + $0x8] sm:$0xff] %v391
    // Predicated region
    $region58: #{dense_image_vae_with_bn.1} parent=1 // pred_check
      _
    $region59: #{dense_image_vae_with_bn.1} parent=1 // pred_check_branch
      %678 = sbr.rel (0) target = $region61
    $region60: #{dense_image_vae_with_bn.1} parent=1 // pred_region
      _
    $region61: #{dense_image_vae_with_bn.1} parent=1 // pred_fallthru
      _
    // Predicated region
    $region62: #{dense_image_vae_with_bn.1} parent=1 // pred_check
      _
    $region63: #{dense_image_vae_with_bn.1} parent=1 // pred_check_branch
      %680 = sbr.rel (0) target = $region65
    $region64: #{dense_image_vae_with_bn.1} parent=1 // pred_region
      _
    $region65: #{dense_image_vae_with_bn.1} parent=1 // pred_fallthru
      _
    // Predicated region
    $region66: #{dense_image_vae_with_bn.1} parent=1 // pred_check
      _
    $region67: #{dense_image_vae_with_bn.1} parent=1 // pred_check_branch
      %682 = sbr.rel (0) target = $region69
    $region68: #{dense_image_vae_with_bn.1} parent=1 // pred_region
      _
    $region69: #{dense_image_vae_with_bn.1} parent=1 // pred_fallthru
      _
    // Predicated region
    $region70: #{dense_image_vae_with_bn.1} parent=1 // pred_check
      _
    $region71: #{dense_image_vae_with_bn.1} parent=1 // pred_check_branch
      %684 = sbr.rel (0) target = $region73
    $region72: #{dense_image_vae_with_bn.1} parent=1 // pred_region
      _
    $region73: #{dense_image_vae_with_bn.1} parent=1 // pred_fallthru
      _
    %685 = vsyncpa [#allocation3], 1
    %686 = vsyncpa [#allocation5], 1
    %687 = vsyncpa [#allocation8], 1

</llo_original>
